<compile_context>
chip_gen: v7x
topology: tpu7x:2x2x1
jax: 0.10.0
libtpu: 0.0.40
codegen_flags: <defaults>
</compile_context>

<pallas_src>
import jax
import jax.numpy as jnp
from jax.experimental import pallas as pl
from jax.experimental.pallas import tpu as pltpu

# ----------------------- synthetic config (small) -----------------------
PREFIX_LEN = 8     # init_token_ids.shape[1]  (prefix sequence length)
HIDDEN     = 32    # config.hidden_size
N_EMBD     = 16    # config.n_embd == head_dim of the KV caches (Linear(n_embd, n_embd))
N_HEADS    = 2
N_LAYERS   = 2
BATCH      = 2
BH         = BATCH * N_HEADS


# ----------------------- Pallas kernel -----------------------
def _fused_transform_kernel(w_ref, x_ref, o_ref):
    # w_ref: (D, D) Linear weight (torch layout: out_features x in_features)
    # x_ref: (D, M) slab = [K_all | V_all^T], M = 2 * L * BH * S on the lane axis
    # o_ref: (D, M) = W @ X   (single MXU matmul, no grid, lane-dense store)
    o_ref[...] = jnp.dot(w_ref[...], x_ref[...], preferred_element_type=jnp.float32)


def fused_kv_transform(w, keys, values):
    """Apply the bias-free Linear `w` to falcon-layout KV caches of ALL layers in one call.

    keys:   (L, BH, D, S) -> transformed keys   (L, BH, D, S)  == Linear(k.transpose(1,2)).transpose(1,2)
    values: (L, BH, S, D) -> transformed values (L, BH, S, D)  == Linear(v)
    """
    L, bh, D, S = keys.shape
    M = L * bh * S
    # Wrapper-side layout plumbing: D on sublanes, merged L*BH*S axis on lanes.
    k_slab = jnp.transpose(keys,   (2, 0, 1, 3)).reshape(D, M)   # (D, M)
    v_slab = jnp.transpose(values, (3, 0, 1, 2)).reshape(D, M)   # (D, M) == V^T per (l, bh)
    x = jnp.concatenate([k_slab, v_slab], axis=1)                # (D, 2*M) lane-dense slab

    y = pl.pallas_call(
        _fused_transform_kernel,
        out_shape=jax.ShapeDtypeStruct((D, 2 * M), jnp.float32),
        in_specs=[
            pl.BlockSpec(memory_space=pltpu.MemorySpace.VMEM),
            pl.BlockSpec(memory_space=pltpu.MemorySpace.VMEM),
        ],
        out_specs=pl.BlockSpec(memory_space=pltpu.MemorySpace.VMEM),
    )(w, x)

    tk = jnp.transpose(y[:, :M].reshape(D, L, bh, S), (1, 2, 0, 3))   # (L, BH, D, S) = W @ K
    tv = jnp.transpose(y[:, M:].reshape(D, L, bh, S), (1, 2, 3, 0))   # (L, BH, S, D) = V @ W^T
    return tk, tv


# ----------------------- glue (plain JAX) -----------------------
def _stub_transformer(inputs_embeds, params):
    # TODO(synk): the real Falcon transformer (self.transformer) is an external pretrained model;
    #             stand-in: deterministic per-layer K/V projections producing falcon-shaped KV caches.
    b, t, _ = inputs_embeds.shape
    pkv = []
    for layer in range(N_LAYERS):
        k_proj = params["k_proj"][layer]   # (HIDDEN, N_HEADS*N_EMBD)
        v_proj = params["v_proj"][layer]
        k = inputs_embeds @ k_proj         # (B, T, N_HEADS*D)
        v = inputs_embeds @ v_proj
        k = k.reshape(b, t, N_HEADS, N_EMBD).transpose(0, 2, 3, 1).reshape(b * N_HEADS, N_EMBD, t)
        v = v.reshape(b, t, N_HEADS, N_EMBD).transpose(0, 2, 1, 3).reshape(b * N_HEADS, t, N_EMBD)
        pkv.append((k, v))
    return tuple(pkv)


def prefix_encoder_forward(params, batch_size):
    # inputs_embeds = self.embedding(virtual_tokens); virtual_tokens == arange(PREFIX_LEN),
    # so the embedding gather is the identity -> use the table directly (dropout eval = identity).
    # TODO(synk): for non-arange/runtime token ids, gather rows via scalar prefetch / pl.Element DMA.
    inputs_embeds = params["embedding"]                                     # (P, H)

    # transformer(inputs_embeds=inputs_embeds.unsqueeze(0).repeat(batch_size, 1, 1))
    repeated = jnp.broadcast_to(inputs_embeds[None], (batch_size, PREFIX_LEN, HIDDEN))
    past_key_values = _stub_transformer(repeated, params)

    # config.transform == True branch: one fused Pallas call for both layers and K + V.
    keys   = jnp.stack([k for (k, _) in past_key_values], axis=0)           # (L, BH, D, S)
    values = jnp.stack([v for (_, v) in past_key_values], axis=0)           # (L, BH, S, D)
    tk, tv = fused_kv_transform(params["transform"], keys, values)

    transformed = tuple((tk[l], tv[l]) for l in range(N_LAYERS))
    return transformed, inputs_embeds.shape[0]


# ----------------------- main -----------------------
if __name__ == "__main__":
    key0 = jax.random.PRNGKey(0)
    k_emb, k_w, k_kp, k_vp = jax.random.split(key0, 4)
    params = {
        # word-embedding-initialized prefix embedding table (float32, as in the module)
        "embedding": jax.random.normal(k_emb, (PREFIX_LEN, HIDDEN), jnp.float32) * 0.02,
        # nn.Linear(n_embd, n_embd, bias=False) weight
        "transform": jax.random.normal(k_w, (N_EMBD, N_EMBD), jnp.float32) * 0.05,
        # stub-transformer projections
        "k_proj": jax.random.normal(k_kp, (N_LAYERS, HIDDEN, N_HEADS * N_EMBD), jnp.float32) * 0.05,
        "v_proj": jax.random.normal(k_vp, (N_LAYERS, HIDDEN, N_HEADS * N_EMBD), jnp.float32) * 0.05,
    }

    pkv, prefix_len = prefix_encoder_forward(params, BATCH)
    pkv = jax.block_until_ready(pkv)

    # sanity check against a pure-JAX reference of the hot path
    emb_ref = params["embedding"]  # virtual_tokens == arange -> gather is the full table
    rep_ref = jnp.broadcast_to(emb_ref[None], (BATCH, PREFIX_LEN, HIDDEN))
    pkv_ref = _stub_transformer(rep_ref, params)
    w = params["transform"]
    for (tk, tv), (kr, vr) in zip(pkv, pkv_ref):
        tk_ref = jnp.einsum("od,bds->bos", w, kr)        # Linear(k.transpose(1,2)).transpose(1,2)
        tv_ref = jnp.einsum("bsd,od->bso", vr, w)        # Linear(v)
        assert tk.shape == kr.shape and tv.shape == vr.shape
        assert jnp.allclose(tk, tk_ref, atol=1e-5), "key transform mismatch"
        assert jnp.allclose(tv, tv_ref, atol=1e-5), "value transform mismatch"
    assert int(prefix_len) == PREFIX_LEN

    print("KERNEL_OK")
</pallas_src>

<mosaic_0001>
module attributes {stable_mosaic.version = 11 : i64} {
  func.func @_fused_transform_kernel(%arg0: memref<16x16xf32, #tpu.memory_space<vmem>>, %arg1: memref<16x128xf32, #tpu.memory_space<vmem>>, %arg2: memref<16x128xf32, #tpu.memory_space<vmem>>) attributes {dimension_semantics = [], scalar_prefetch = 0 : i64, scratch_operands = 0 : i64, tpu.core_type = #tpu.core_type<tc>} {
    %c0 = arith.constant 0 : index
    %c0_0 = arith.constant 0 : index
    %0 = vector.load %arg0[%c0, %c0_0] : memref<16x16xf32, #tpu.memory_space<vmem>>, vector<16x16xf32>
    %c0_1 = arith.constant 0 : index
    %c0_2 = arith.constant 0 : index
    %1 = vector.load %arg1[%c0_1, %c0_2] : memref<16x128xf32, #tpu.memory_space<vmem>>, vector<16x128xf32>
    %cst = arith.constant dense<0.000000e+00> : vector<16x128xf32>
    %2 = tpu.matmul %0, %1, %cst {dimension_numbers = #tpu.dot_dimension_numbers<[1], [0], [0], [1], [0, 0, 1, 1], [], []>} : vector<16x16xf32>, vector<16x128xf32>, vector<16x128xf32> -> vector<16x128xf32>
    %c0_3 = arith.constant 0 : index
    %c0_4 = arith.constant 0 : index
    %3 = vector.load %arg2[%c0_3, %c0_4] : memref<16x128xf32, #tpu.memory_space<vmem>>, vector<16x128xf32>
    tpu.vector_store %arg2[%c0_3, %c0_4], %2 {strides = array<i32>} : memref<16x128xf32, #tpu.memory_space<vmem>>, vector<16x128xf32>,
    return
  }
}

</mosaic_0001>

<llo_original>
// kernel: tpu_custom_call.1
$region0: #{tpu_custom_call.1}
  #allocation0 [shape = 'u32[]', space=smem, size = 0x4, offset = 0x4, fixed_abs, tag = 'smem constant byte address 0x4 - core index']
  #allocation1 [shape = 'u32[144,128]{1,0:T(1,128)}', space=vmem, size = 0x12000, scoped, tag = 'internal scratch']
  %s0 = inlined_call_operand.hbm [shape: f32[16,16], index: 0, kind: input, shape index: {}]
  %s1 = inlined_call_operand.hbm [shape: f32[16,128], index: 1, kind: input, shape index: {}]
  %s2 = inlined_call_operand.hbm [shape: f32[16,128], index: 2, kind: output, shape index: {}]
  %s3 = sld [smem:[#allocation0]]
  $region26: #{tpu_custom_call.1} parent=0
    _
  %s5 = ssub.s32 1, %s3
  %s6 = scalar_select 0, %s5, %s3
  $region1: #{tpu_custom_call.1} parent=0
    #allocation2 [shape = 'u8[8192]{0}', space=vmem, size = 0x2000, scoped, tag = 'input window, operand 0, single buffered']
    #allocation3 [shape = 's32[1]{0}', space=sflag, size = 0x4, scoped, tag = 'scoped memory for tpu_custom_call.1']
    #allocation4 [shape = 's32[1]{0}', space=sflag, size = 0x4, scoped, tag = 'scoped memory for tpu_custom_call.1']
    #allocation5 [shape = 'u8[8192]{0}', space=vmem, size = 0x2000, scoped, tag = 'input window, operand 1, single buffered']
    #allocation6 [shape = 's32[1]{0}', space=sflag, size = 0x4, scoped, tag = 'scoped memory for tpu_custom_call.1']
    #allocation7 [shape = 'u8[8192]{0}', space=vmem, size = 0x2000, scoped, tag = 'output window, operand 0, single buffered']
    %7 = vsyncpa [#allocation3], 0
    %8 = vsyncpa [#allocation6], 0
    %9 = vsyncpa [#allocation4], 0
    // Predicated region
    $region2: #{tpu_custom_call.1} parent=1 // pred_check
      _
    $region3: #{tpu_custom_call.1} parent=1 // pred_check_branch
      %11 = sbr.rel (0) target = $region5
    $region4: #{tpu_custom_call.1} parent=1 // pred_region
      %s13 = ssub.s32 256, 256
      %14 = vsyncadd [#allocation3], %s13
      %s15 = sshll.u32 [#allocation2], 4
      %s16 = int_to_ptr.vmem [resolvable:$true] %s15
      %21 = dma.hbm_to_vmem [thread:$0]  %s0, 256, %s16, [#allocation3], 128, 128, 8
    $region5: #{tpu_custom_call.1} parent=1 // pred_fallthru
      _
    // Predicated region
    $region6: #{tpu_custom_call.1} parent=1 // pred_check
      _
    $region7: #{tpu_custom_call.1} parent=1 // pred_check_branch
      %23 = sbr.rel (0) target = $region9
    $region8: #{tpu_custom_call.1} parent=1 // pred_region
      %s25 = ssub.s32 256, 256
      %26 = vsyncadd [#allocation6], %s25
      %s27 = sshll.u32 [#allocation5], 4
      %s28 = int_to_ptr.vmem [resolvable:$true] %s27
      %33 = dma.hbm_to_vmem [thread:$0]  %s1, 256, %s28, [#allocation6], 128, 128, 8
    $region9: #{tpu_custom_call.1} parent=1 // pred_fallthru
      _
    // Predicated region
    $region10: #{tpu_custom_call.1} parent=1 // pred_check
      _
    $region11: #{tpu_custom_call.1} parent=1 // pred_check_branch
      %35 = sbr.rel (0) target = $region13
    $region12: #{tpu_custom_call.1} parent=1 // pred_region
      %36 = dma.done [#allocation3], 256
    $region13: #{tpu_custom_call.1} parent=1 // pred_fallthru
      _
    // Predicated region
    $region14: #{tpu_custom_call.1} parent=1 // pred_check
      _
    $region15: #{tpu_custom_call.1} parent=1 // pred_check_branch
      %38 = sbr.rel (0) target = $region17
    $region16: #{tpu_custom_call.1} parent=1 // pred_region
      %39 = dma.done [#allocation6], 256
    $region17: #{tpu_custom_call.1} parent=1 // pred_fallthru
      _
    %v40 = vld [vmem:[#allocation2] sm:$0xff]
    %v41 = vld [vmem:[#allocation2 + $0x8] sm:$0xff]
    %v42 = vld [vmem:[#allocation5] sm:$0xff]
    %v43 = vld [vmem:[#allocation5 + $0x8] sm:$0xff]
    %vm44 = vcmask 130048
    %v46 = vsel %vm44, %v40, 0
    %v49 = vsel %vm44, %v41, 0
    %51 = vmatprep.subr.mxu0 0.0
    %52 = vmatpush1.msra.mxu0 %v42
    %53 = vmatprep.subr.mxu0 0.0
    %54 = vmatpush1.msra.mxu0 %v43
    %55 = vmatprep.subr.mxu0 0.0
    %56 = vmatpush1.msra.mxu0 0.0
    %57 = vmatprep.subr.mxu0 0.0
    %58 = vmatpush1.msra.mxu0 0.0
    %59 = vmatprep.subr.mxu0 0.0
    %60 = vmatpush1.msra.mxu0 0.0
    %61 = vmatprep.subr.mxu0 0.0
    %62 = vmatpush1.msra.mxu0 0.0
    %63 = vmatprep.subr.mxu0 0.0
    %64 = vmatpush1.msra.mxu0 0.0
    %65 = vmatprep.subr.mxu0 0.0
    %66 = vmatpush1.msra.mxu0 0.0
    %67 = vmatprep.subr.mxu0 0.0
    %68 = vmatpush1.msra.mxu0 0.0
    %69 = vmatprep.subr.mxu0 0.0
    %70 = vmatpush1.msra.mxu0 0.0
    %71 = vmatprep.subr.mxu0 0.0
    %72 = vmatpush1.msra.mxu0 0.0
    %73 = vmatprep.subr.mxu0 0.0
    %74 = vmatpush1.msra.mxu0 0.0
    %75 = vmatprep.subr.mxu0 0.0
    %76 = vmatpush1.msra.mxu0 0.0
    %77 = vmatprep.subr.mxu0 0.0
    %78 = vmatpush1.msra.mxu0 0.0
    %79 = vmatprep.subr.mxu0 0.0
    %80 = vmatpush1.msra.mxu0 0.0
    %81 = vmatprep.subr.mxu0 0.0
    %82 = vmatpush1.msra.mxu0 0.0
    %83 = vmatprep.subr.mxu0 0.0
    %84 = vmatpush1.msra.mxu0 0.0
    %85 = vmatprep.subr.mxu0 0.0
    %86 = vmatpush1.msra.mxu0 0.0
    %87 = vmatprep.subr.mxu0 0.0
    %88 = vmatpush1.msra.mxu0 0.0
    %89 = vmatprep.subr.mxu0 0.0
    %90 = vmatpush1.msra.mxu0 0.0
    %91 = vmatprep.subr.mxu0 0.0
    %92 = vmatpush1.msra.mxu0 0.0
    %93 = vmatprep.subr.mxu0 0.0
    %94 = vmatpush1.msra.mxu0 0.0
    %95 = vmatprep.subr.mxu0 0.0
    %96 = vmatpush1.msra.mxu0 0.0
    %97 = vmatprep.subr.mxu0 0.0
    %98 = vmatpush1.msra.mxu0 0.0
    %99 = vmatprep.subr.mxu0 0.0
    %100 = vmatpush1.msra.mxu0 0.0
    %101 = vmatprep.subr.mxu0 0.0
    %102 = vmatpush1.msra.mxu0 0.0
    %103 = vmatprep.subr.mxu0 0.0
    %104 = vmatpush1.msra.mxu0 0.0
    %105 = vmatprep.subr.mxu0 0.0
    %106 = vmatpush1.msra.mxu0 0.0
    %107 = vmatprep.subr.mxu0 0.0
    %108 = vmatpush1.msra.mxu0 0.0
    %109 = vmatprep.subr.mxu0 0.0
    %110 = vmatpush1.msra.mxu0 0.0
    %111 = vmatprep.subr.mxu0 0.0
    %112 = vmatpush1.msra.mxu0 0.0
    %113 = vmatprep.subr.mxu0 0.0
    %114 = vmatpush1.msra.mxu0 0.0
    %115 = vmatprep.mubr.f32.mxu0 0.0
    %116 = vmatmul.mubr.f32.gmra.mrb[0].mxu0 %v46
    %v117 = vpop.f32.mrb[0].mxu0
    %v118 = vadd.f32 0.0, %v117
    %v119 = vpop.f32.mrb[0].mxu0
    %120 = vmatprep.mubr.f32.mxu0 0.0
    %121 = vmatmul.mubr.f32.gmra.mrb[0].mxu0 %v49
    %v122 = vpop.f32.mrb[0].mxu0
    %v123 = vadd.f32 0.0, %v122
    %v124 = vpop.f32.mrb[0].mxu0
    %125 = vdwg.mxu0
    %126 = vst [vmem:[#allocation7] sm:$0xff] %v118
    %127 = vst [vmem:[#allocation7 + $0x8] sm:$0xff] %v123
    // Predicated region
    $region18: #{tpu_custom_call.1} parent=1 // pred_check
      _
    $region19: #{tpu_custom_call.1} parent=1 // pred_check_branch
      %129 = sbr.rel (0) target = $region21
    $region20: #{tpu_custom_call.1} parent=1 // pred_region
      %s131 = ssub.s32 256, 256
      %132 = vsyncadd [#allocation4], %s131
      %s133 = sshll.u32 [#allocation7], 4
      %s134 = int_to_ptr.vmem [resolvable:$true] %s133
      %139 = dma.vmem_to_hbm [thread:$0]  %s134, 256, %s2, [#allocation4], 128, 128, 8
    $region21: #{tpu_custom_call.1} parent=1 // pred_fallthru
      _
    // Predicated region
    $region22: #{tpu_custom_call.1} parent=1 // pred_check
      _
    $region23: #{tpu_custom_call.1} parent=1 // pred_check_branch
      %141 = sbr.rel (0) target = $region25
    $region24: #{tpu_custom_call.1} parent=1 // pred_region
      %142 = dma.done [#allocation4], 256
    $region25: #{tpu_custom_call.1} parent=1 // pred_fallthru
      _
    %143 = vsyncpa [#allocation3], 1
    %144 = vsyncpa [#allocation6], 1
    %145 = vsyncpa [#allocation4], 1

</llo_original>
